<compile_context>
chip_gen: v5e
topology: v5e:2x2
jax: 0.10.0
libtpu: 0.0.40
codegen_flags: <defaults>
</compile_context>

<pallas_src>
import jax
import jax.numpy as jnp
from jax.experimental import pallas as pl
from jax.experimental.pallas import tpu as pltpu


def _pos_embed_kernel(x_ref, pos_ref, o_ref):
    # pos_ref has a leading size-1 dim -> VPU broadcast over the batch axis.
    # Cast in-kernel (VALU slots have huge slack for a streaming add) instead
    # of a wrapper-side astype that would cost a full extra HBM pass.
    o_ref[...] = (x_ref[...] + pos_ref[...]).astype(o_ref.dtype)


def _sublane_pack(*dtypes):
    # Rows per fully-packed sublane group: 8 for 32-bit, 16 for bf16/f16,
    # 32 for int8/fp8 (sub-32-bit dtypes pack along sublanes).
    min_itemsize = min(jnp.dtype(d).itemsize for d in dtypes)
    return 8 * max(1, 4 // min_itemsize)


def positional_embedding_1d(x, pos_embedding, *, x_block_bytes=6 * 1024 * 1024):
    """out = x + pos_embedding.

    x:             (B, S, D)  -- any float dtype
    pos_embedding: (1, S, D)
    """
    B, S, D = x.shape
    assert pos_embedding.shape == (1, S, D), pos_embedding.shape

    out_dtype = jnp.result_type(x.dtype, pos_embedding.dtype)
    x_sz = jnp.dtype(x.dtype).itemsize
    p_sz = jnp.dtype(pos_embedding.dtype).itemsize
    o_sz = jnp.dtype(out_dtype).itemsize
    sz = max(x_sz, o_sz)  # size blocks by the fatter of x / out
    pack = _sublane_pack(x.dtype, pos_embedding.dtype, out_dtype)

    L = S * D
    # Flatten (S,D) into one lane axis only when it actually buys lane-dense
    # stores (D not 128-aligned) AND the flattened row is either 128-splittable
    # or fits a single block.  Otherwise keep the native 3-D layout (no
    # relayout copy around the custom call).
    flatten = (D % 128 != 0) and (L % 128 == 0 or L * sz <= x_block_bytes)

    if flatten:
        x_in = x.reshape(B, L)
        p_in = pos_embedding.reshape(1, L)

        # ---- lane (last-dim) tile -------------------------------------
        if L * sz <= x_block_bytes or L % 128 != 0:
            tl = L  # whole row per tile
        else:
            min_rows = min(B, pack)
            tl = (x_block_bytes // (sz * min_rows)) // 128 * 128
            tl = max(128, min(tl, L))

        # ---- batch (sublane) tile, bounded by the byte budget ----------
        rows = max(1, x_block_bytes // (tl * sz))
        if rows >= B:
            tb = B
        elif rows >= pack:
            tb = (rows // pack) * pack
        else:
            # Whole-row tiles so large that even `pack` rows exceed the
            # budget: keep the VMEM footprint bounded and accept partially
            # packed sublanes on this rare path.
            tb = rows

        n_l, n_b = pl.cdiv(L, tl), pl.cdiv(B, tb)
        # pos depends only on the OUTER (lane) axis -> fetched once per outer
        # step, not once per batch tile.
        grid = (n_l, n_b)
        in_specs = [
            pl.BlockSpec((tb, tl), lambda l, b: (b, l)),
            pl.BlockSpec((1, tl), lambda l, b: (0, l)),
        ]
        out_spec = pl.BlockSpec((tb, tl), lambda l, b: (b, l))
        out_shape = jax.ShapeDtypeStruct((B, L), out_dtype)
        blk_elems = tb * tl
        pos_blk_elems = tl
    else:
        # Native 3-D tiling: blocks (tb, ts, D); (S, D) stay on (sublane, lane).
        x_in = x
        p_in = pos_embedding
        row_bytes = D * sz

        if S * row_bytes <= x_block_bytes or S <= pack:
            ts = S
        else:
            ts = (x_block_bytes // row_bytes) // pack * pack
            ts = min(max(pack, ts), S)

        rows = max(1, x_block_bytes // (ts * row_bytes))
        tb = min(B, rows)
        n_s, n_b = pl.cdiv(S, ts), pl.cdiv(B, tb)

        # v7x megacore balance: for big inputs make sure both TensorCores get
        # several slabs via the "parallel" axes.
        if B * S * D * sz >= (8 << 20):
            while n_s * n_b < 4 and tb > 1:
                tb = max(1, tb // 2)
                n_b = pl.cdiv(B, tb)

        # pos depends only on the OUTER (seq) axis -> reused across batch tiles.
        grid = (n_s, n_b)
        in_specs = [
            pl.BlockSpec((tb, ts, D), lambda s, b: (b, s, 0)),
            pl.BlockSpec((1, ts, D), lambda s, b: (0, s, 0)),
        ]
        out_spec = pl.BlockSpec((tb, ts, D), lambda s, b: (b, s, 0))
        out_shape = jax.ShapeDtypeStruct((B, S, D), out_dtype)
        blk_elems = tb * ts * D
        pos_blk_elems = ts * D

    # Explicit scoped-VMEM limit sized to the double-buffered blocks
    # (x + out + pos, 2 buffers each) plus slack.  With the 6 MiB default
    # budget this stays ~27 MiB -- within v7x's 64 MiB physical VMEM and an
    # explicit override of v5e's 16 MiB default.
    vmem_limit = 2 * (blk_elems * x_sz + blk_elems * o_sz + pos_blk_elems * p_sz)
    vmem_limit = max(vmem_limit + (2 << 20), 16 << 20)

    out = pl.pallas_call(
        _pos_embed_kernel,
        out_shape=out_shape,
        grid=grid,
        in_specs=in_specs,
        out_specs=out_spec,
        compiler_params=pltpu.CompilerParams(
            dimension_semantics=("parallel", "parallel"),
            vmem_limit_bytes=int(vmem_limit),
        ),
        cost_estimate=pl.CostEstimate(
            flops=B * L,
            transcendentals=0,
            # x read + out write + pos read once (its block index is constant
            # along the inner grid axis, so it is not re-fetched per step).
            bytes_accessed=B * L * (x_sz + o_sz) + L * p_sz,
        ),
    )(x_in, p_in)

    return out.reshape(B, S, D)


if __name__ == "__main__":
    B, S, D = 2, 8, 32

    key = jax.random.PRNGKey(0)
    kx, kp = jax.random.split(key)

    x = jax.random.normal(kx, (B, S, D), dtype=jnp.float32)
    # nn.Parameter(torch.zeros(...)) is zeros; use small random values so the
    # add is actually exercised.
    pos_embedding = 0.02 * jax.random.normal(kp, (1, S, D), dtype=jnp.float32)

    out = positional_embedding_1d(x, pos_embedding)
    jax.block_until_ready(out)

    ref = x + pos_embedding  # pure-JAX reference
    assert out.shape == (B, S, D)
    assert out.dtype == ref.dtype
    assert jnp.allclose(out, ref, atol=1e-6, rtol=1e-6)

    print("KERNEL_OK")
</pallas_src>

<mosaic_0001>
module attributes {stable_mosaic.version = 11 : i64} {
  func.func @_pos_embed_kernel(%arg0: i32, %arg1: i32, %arg2: memref<2x256xf32, #tpu.memory_space<vmem>>, %arg3: memref<1x256xf32, #tpu.memory_space<vmem>>, %arg4: memref<2x256xf32, #tpu.memory_space<vmem>>) attributes {dimension_semantics = [#tpu.dimension_semantics<parallel>, #tpu.dimension_semantics<parallel>], iteration_bounds = array<i64: 1, 1>, scalar_prefetch = 0 : i64, scratch_operands = 0 : i64, tpu.core_type = #tpu.core_type<tc>, window_params = [{transform_indices = @transform_0, window_bounds = array<i64: 2, 256>}, {transform_indices = @transform_1, window_bounds = array<i64: 1, 256>}, {transform_indices = @transform_2, window_bounds = array<i64: 2, 256>}]} {
    %c0 = arith.constant 0 : index
    %c0_0 = arith.constant 0 : index
    %0 = vector.load %arg2[%c0, %c0_0] : memref<2x256xf32, #tpu.memory_space<vmem>>, vector<2x256xf32>
    %c0_1 = arith.constant 0 : index
    %c0_2 = arith.constant 0 : index
    %1 = vector.load %arg3[%c0_1, %c0_2] : memref<1x256xf32, #tpu.memory_space<vmem>>, vector<1x256xf32>
    %2 = vector.broadcast %1 : vector<1x256xf32> to vector<2x256xf32>
    %3 = arith.addf %0, %2 : vector<2x256xf32>
    %c0_3 = arith.constant 0 : index
    %c0_4 = arith.constant 0 : index
    %4 = vector.load %arg4[%c0_3, %c0_4] : memref<2x256xf32, #tpu.memory_space<vmem>>, vector<2x256xf32>
    tpu.vector_store %arg4[%c0_3, %c0_4], %3 {strides = array<i32>} : memref<2x256xf32, #tpu.memory_space<vmem>>, vector<2x256xf32>,
    return
  }
  func.func @transform_0(%arg0: i32, %arg1: i32) -> (i32, i32) {
    %c0_i32 = arith.constant 0 : i32
    return %arg1, %arg0 : i32, i32
  }
  func.func @transform_1(%arg0: i32, %arg1: i32) -> (i32, i32) {
    %c0_i32 = arith.constant 0 : i32
    %c0_i32_0 = arith.constant 0 : i32
    return %c0_i32, %arg0 : i32, i32
  }
  func.func @transform_2(%arg0: i32, %arg1: i32) -> (i32, i32) {
    %c0_i32 = arith.constant 0 : i32
    return %arg1, %arg0 : i32, i32
  }
}

</mosaic_0001>

<llo_original>
// kernel: tpu_custom_call.1
$region0: #{tpu_custom_call.1}
  #allocation0 [shape = 'u32[]', space=smem, size = 0x4, offset = 0x4, fixed_abs, tag = 'smem constant byte address 0x4 - core index']
  #allocation1 [shape = 'u32[72,128]{1,0:T(1,128)}', space=vmem, size = 0x9000, scoped, tag = 'internal scratch']
  %s0 = inlined_call_operand.hbm [shape: f32[2,256], index: 0, kind: input, shape index: {}]
  %s1 = inlined_call_operand.hbm [shape: f32[1,256], index: 1, kind: input, shape index: {}]
  %s2 = inlined_call_operand.hbm [shape: f32[2,256], index: 2, kind: output, shape index: {}]
  %s3 = sld [smem:[#allocation0]]
  $region26: #{tpu_custom_call.1} parent=0
    _
  %s5 = ssub.s32 1, %s3
  %s6 = scalar_select 0, %s5, %s3
  $region1: #{tpu_custom_call.1} parent=0
    #allocation2 [shape = 'u8[2048]{0}', space=vmem, size = 0x800, scoped, tag = 'input window, operand 0, single buffered']
    #allocation3 [shape = 's32[1]{0}', space=sflag, size = 0x4, scoped, tag = 'scoped memory for tpu_custom_call.1']
    #allocation4 [shape = 's32[1]{0}', space=sflag, size = 0x4, scoped, tag = 'scoped memory for tpu_custom_call.1']
    #allocation5 [shape = 'u8[1024]{0}', space=vmem, size = 0x400, scoped, tag = 'input window, operand 1, single buffered']
    #allocation6 [shape = 's32[1]{0}', space=sflag, size = 0x4, scoped, tag = 'scoped memory for tpu_custom_call.1']
    #allocation7 [shape = 'u8[2048]{0}', space=vmem, size = 0x800, scoped, tag = 'output window, operand 0, single buffered']
    %7 = vsyncpa [#allocation3], 0
    %8 = vsyncpa [#allocation6], 0
    %9 = vsyncpa [#allocation4], 0
    // Predicated region
    $region2: #{tpu_custom_call.1} parent=1 // pred_check
      _
    $region3: #{tpu_custom_call.1} parent=1 // pred_check_branch
      %11 = sbr.rel (0) target = $region5
    $region4: #{tpu_custom_call.1} parent=1 // pred_region
      %13 = vsyncadd [#allocation3], 0
      %s15 = sshll.u32 %s0, 4
      %s16 = int_to_ptr.hbm [resolvable:$true] %s15
      %s17 = sshll.u32 [#allocation2], 4
      %s18 = int_to_ptr.vmem [resolvable:$true] %s17
      %20 = dma.hbm_to_vmem [thread:$0]  %s16, 64, %s18, [#allocation3]
    $region5: #{tpu_custom_call.1} parent=1 // pred_fallthru
      _
    // Predicated region
    $region6: #{tpu_custom_call.1} parent=1 // pred_check
      _
    $region7: #{tpu_custom_call.1} parent=1 // pred_check_branch
      %22 = sbr.rel (0) target = $region9
    $region8: #{tpu_custom_call.1} parent=1 // pred_region
      %24 = vsyncadd [#allocation6], 0
      %s26 = sshll.u32 %s1, 4
      %s27 = int_to_ptr.hbm [resolvable:$true] %s26
      %s28 = sshll.u32 [#allocation5], 4
      %s29 = int_to_ptr.vmem [resolvable:$true] %s28
      %31 = dma.hbm_to_vmem [thread:$0]  %s27, 32, %s29, [#allocation6]
    $region9: #{tpu_custom_call.1} parent=1 // pred_fallthru
      _
    // Predicated region
    $region10: #{tpu_custom_call.1} parent=1 // pred_check
      _
    $region11: #{tpu_custom_call.1} parent=1 // pred_check_branch
      %33 = sbr.rel (0) target = $region13
    $region12: #{tpu_custom_call.1} parent=1 // pred_region
      %35 = dma.done [#allocation3], 64
    $region13: #{tpu_custom_call.1} parent=1 // pred_fallthru
      _
    // Predicated region
    $region14: #{tpu_custom_call.1} parent=1 // pred_check
      _
    $region15: #{tpu_custom_call.1} parent=1 // pred_check_branch
      %37 = sbr.rel (0) target = $region17
    $region16: #{tpu_custom_call.1} parent=1 // pred_region
      %39 = dma.done [#allocation6], 32
    $region17: #{tpu_custom_call.1} parent=1 // pred_fallthru
      _
    %v40 = vld [vmem:[#allocation2] sm:$0xf]
    %v41 = vld [vmem:[#allocation5] sm:$0x3]
    %v43 = vperm.slane %v41, 0
    %v44 = vperm.slane %v41, 1
    %v45 = vrot.slane %v44, 6
    %vm46 = vcmask 1041408
    %v47 = vsel %vm46, %v43, %v45
    %v49 = vadd.f32 %v40, %v47
    %50 = vst [vmem:[#allocation7] sm:$0xf] %v49
    // Predicated region
    $region18: #{tpu_custom_call.1} parent=1 // pred_check
      _
    $region19: #{tpu_custom_call.1} parent=1 // pred_check_branch
      %52 = sbr.rel (0) target = $region21
    $region20: #{tpu_custom_call.1} parent=1 // pred_region
      %54 = vsyncadd [#allocation4], 0
      %s56 = sshll.u32 [#allocation7], 4
      %s57 = int_to_ptr.vmem [resolvable:$true] %s56
      %s58 = sshll.u32 %s2, 4
      %s59 = int_to_ptr.hbm [resolvable:$true] %s58
      %61 = dma.vmem_to_hbm [thread:$0]  %s57, 64, %s59, [#allocation4]
    $region21: #{tpu_custom_call.1} parent=1 // pred_fallthru
      _
    // Predicated region
    $region22: #{tpu_custom_call.1} parent=1 // pred_check
      _
    $region23: #{tpu_custom_call.1} parent=1 // pred_check_branch
      %63 = sbr.rel (0) target = $region25
    $region24: #{tpu_custom_call.1} parent=1 // pred_region
      %65 = dma.done [#allocation4], 64
    $region25: #{tpu_custom_call.1} parent=1 // pred_fallthru
      _
    %66 = vsyncpa [#allocation3], 1
    %67 = vsyncpa [#allocation6], 1
    %68 = vsyncpa [#allocation4], 1

</llo_original>
